<compile_context>
chip_gen: v7x
topology: tpu7x:2x2x1
jax: 0.10.0
libtpu: 0.0.40
codegen_flags: <defaults>
</compile_context>

<pallas_src>
import functools

import jax
import jax.numpy as jnp
from jax.experimental import pallas as pl
from jax.experimental.pallas import tpu as pltpu

IN_FEATURES = 28 * 28          # 784
HIDDEN = 128
OUT_FEATURES = 10
OUT_PADDED = 128               # lane-dense logits width stored by the kernel


# --------------------------------------------------------------------------
# Kernel
# --------------------------------------------------------------------------
def _mlp_kernel(x_ref, w1_ref, b1_ref, w2_ref, b2_ref, logits_ref, hidden_ref):
    # x_ref: (TM, 784) f32 (or bf16)   w1_ref: (784, 128) bf16
    # b1_ref: (1, 128) f32             w2_ref: (128, 128) bf16 (zero-padded)
    # b2_ref: (1, 128) f32
    # logits_ref: (TM, 128) f32        hidden_ref: (TM, 128) f32
    x_bf16 = x_ref[...].astype(jnp.bfloat16)      # VPU cast hides under x DMA
    z = jnp.dot(x_bf16, w1_ref[...], preferred_element_type=jnp.float32)
    z = jnp.maximum(z + b1_ref[...], 0.0)         # fused bias + ReLU
    hidden_ref[...] = z
    logits = jnp.dot(z.astype(w2_ref.dtype), w2_ref[...],
                     preferred_element_type=jnp.float32)
    logits_ref[...] = logits + b2_ref[...]


# --------------------------------------------------------------------------
# One-time parameter preparation (hoisted out of the per-call path)
# --------------------------------------------------------------------------
def prepare_params(w1, b1, w2, b2):
    """Convert PyTorch-layout params (out, in) to kernel layout.

    Returns (w1_t bf16 (784,128), b1 f32 (1,128),
             w2_t bf16 (128,128) zero-padded, b2 f32 (1,128) zero-padded).
    """
    w1_t = jnp.asarray(w1, jnp.float32).T.astype(jnp.bfloat16)      # (784, 128)
    b1_2d = jnp.asarray(b1, jnp.float32).reshape(1, HIDDEN)
    w2_t = jnp.zeros((HIDDEN, OUT_PADDED), jnp.bfloat16)
    w2_t = w2_t.at[:, :OUT_FEATURES].set(
        jnp.asarray(w2, jnp.float32).T.astype(jnp.bfloat16))        # (128, 128)
    b2_2d = jnp.zeros((1, OUT_PADDED), jnp.float32)
    b2_2d = b2_2d.at[0, :OUT_FEATURES].set(jnp.asarray(b2, jnp.float32))
    return w1_t, b1_2d, w2_t, b2_2d


# --------------------------------------------------------------------------
# Per-generation configuration & tile selection
# --------------------------------------------------------------------------
def _device_config():
    """Tile cap / scoped-VMEM limit / minimum grid length per TPU generation."""
    kind = ""
    try:
        kind = jax.devices()[0].device_kind.lower()
    except Exception:
        pass
    if ("v5" in kind) or ("v6" in kind):
        # 128 MiB VMEM, single TensorCore per chip: big tiles, generous limit.
        return {"tm_cap": 4096, "vmem_limit": 80 << 20, "min_grid": 1}
    # v7x (64 MiB VMEM per TC, 2 TCs) or unknown: conservative VMEM, and
    # require >= 2 grid steps so the "parallel" axis splits across both TCs.
    return {"tm_cap": 2048, "vmem_limit": 40 << 20, "min_grid": 2}


def _round_up(n, m):
    return ((n + m - 1) // m) * m


def _choose_tiling(batch, tm_cap, min_grid):
    """Return (tm, padded_batch).

    Prefers a tm that divides batch exactly (no jnp.pad HBM pass) while giving
    at least `min_grid` grid steps; falls back to padding only for ragged
    batches with no suitable 8-aligned divisor.
    """
    target = max(8, min(tm_cap, _round_up(pl.cdiv(batch, max(min_grid, 1)), 8)))
    if batch % 8 == 0:
        for tm in range(target, 7, -8):
            if batch % tm == 0 and batch // tm >= min_grid:
                return tm, batch
    # Ragged batch (or no divisor found): pad up to a multiple of the tile.
    return target, _round_up(batch, target)


# --------------------------------------------------------------------------
# pallas_call wrapper
# --------------------------------------------------------------------------
@functools.partial(jax.jit, static_argnames=("batch", "tm", "vmem_limit"))
def _forward_padded(x2d, w1_t, b1_2d, w2_t, b2_2d, *, batch, tm, vmem_limit):
    grid = (batch // tm,)
    x_bytes = jnp.dtype(x2d.dtype).itemsize
    cost = pl.CostEstimate(
        flops=2 * batch * (IN_FEATURES * HIDDEN + HIDDEN * OUT_PADDED),
        transcendentals=0,
        bytes_accessed=(batch * IN_FEATURES * x_bytes          # x
                        + batch * (HIDDEN + OUT_PADDED) * 4    # hidden + logits
                        + IN_FEATURES * HIDDEN * 2 + HIDDEN * OUT_PADDED * 2
                        + (HIDDEN + OUT_PADDED) * 4),
    )
    logits_pad, hidden = pl.pallas_call(
        _mlp_kernel,
        out_shape=(
            jax.ShapeDtypeStruct((batch, OUT_PADDED), jnp.float32),
            jax.ShapeDtypeStruct((batch, HIDDEN), jnp.float32),
        ),
        grid=grid,
        in_specs=[
            pl.BlockSpec((tm, IN_FEATURES), lambda i: (i, 0)),      # x tile
            pl.BlockSpec((IN_FEATURES, HIDDEN), lambda i: (0, 0)),  # W1 resident
            pl.BlockSpec((1, HIDDEN), lambda i: (0, 0)),            # b1 resident
            pl.BlockSpec((HIDDEN, OUT_PADDED), lambda i: (0, 0)),   # W2 resident
            pl.BlockSpec((1, OUT_PADDED), lambda i: (0, 0)),        # b2 resident
        ],
        out_specs=(
            pl.BlockSpec((tm, OUT_PADDED), lambda i: (i, 0)),
            pl.BlockSpec((tm, HIDDEN), lambda i: (i, 0)),
        ),
        compiler_params=pltpu.CompilerParams(
            dimension_semantics=("parallel",),        # megacore split on v7x
            vmem_limit_bytes=vmem_limit,
        ),
        cost_estimate=cost,
    )(x2d, w1_t, b1_2d, w2_t, b2_2d)
    return logits_pad, hidden


def two_layer_nn_forward(x, w1_t, b1_2d, w2_t, b2_2d):
    """Forward pass matching TwoLayerNN.forward.

    Args:
      x: any shape whose elements flatten to (B, 784), e.g. (B, 1, 28, 28).
      w1_t, b1_2d, w2_t, b2_2d: output of prepare_params().

    Returns:
      (logits (B, 10) f32, hidden (B, 128) f32) — same order as PyTorch.
    """
    x2d = jnp.reshape(x, (-1, IN_FEATURES))
    # Keep the producer dtype (f32 or bf16) — the bf16 cast happens in-kernel,
    # avoiding an extra HBM pass over x.
    if x2d.dtype not in (jnp.float32, jnp.bfloat16):
        x2d = x2d.astype(jnp.float32)
    batch = x2d.shape[0]

    cfg = _device_config()
    tm, batch_pad = _choose_tiling(batch, cfg["tm_cap"], cfg["min_grid"])
    if batch_pad != batch:
        # Rare path (ragged batch with no 8-aligned divisor).
        x2d = jnp.pad(x2d, ((0, batch_pad - batch), (0, 0)))

    logits_pad, hidden = _forward_padded(
        x2d, w1_t, b1_2d, w2_t, b2_2d,
        batch=batch_pad, tm=tm, vmem_limit=cfg["vmem_limit"])

    # Padded rows (if any) hold relu(b1)/b2 garbage — always slice them off.
    if batch_pad != batch:
        return logits_pad[:batch, :OUT_FEATURES], hidden[:batch]
    return logits_pad[:, :OUT_FEATURES], hidden


# --------------------------------------------------------------------------
# Deterministic init matching PyTorch Linear shapes (out, in)
# --------------------------------------------------------------------------
def init_params(key, hidden_size=HIDDEN):
    k1, k2, k3, k4 = jax.random.split(key, 4)
    s1 = 1.0 / jnp.sqrt(IN_FEATURES)
    s2 = 1.0 / jnp.sqrt(hidden_size)
    w1 = jax.random.uniform(k1, (hidden_size, IN_FEATURES), jnp.float32, -s1, s1)
    b1 = jax.random.uniform(k2, (hidden_size,), jnp.float32, -s1, s1)
    w2 = jax.random.uniform(k3, (OUT_FEATURES, hidden_size), jnp.float32, -s2, s2)
    b2 = jax.random.uniform(k4, (OUT_FEATURES,), jnp.float32, -s2, s2)
    return w1, b1, w2, b2


if __name__ == "__main__":
    key = jax.random.PRNGKey(0)
    kx, kx2, kp = jax.random.split(key, 3)

    w1, b1, w2, b2 = init_params(kp)
    params = prepare_params(w1, b1, w2, b2)   # one-time transpose/pad/bf16

    def reference(x):
        x2d = jnp.reshape(x, (-1, IN_FEATURES)).astype(jnp.float32)
        z = jnp.maximum(x2d @ w1.T + b1, 0.0)
        return x2d.shape[0], z @ w2.T + b2, z

    # 1) Aligned batch (no padding path), MNIST-style NCHW input.
    x = jax.random.normal(kx, (8, 1, 28, 28), dtype=jnp.float32)
    logits, hidden = two_layer_nn_forward(x, *params)
    jax.block_until_ready((logits, hidden))
    b, y_ref, z_ref = reference(x)
    assert logits.shape == (b, OUT_FEATURES) and hidden.shape == (b, HIDDEN)
    assert jnp.allclose(hidden, z_ref, atol=5e-2, rtol=5e-2), "hidden mismatch"
    assert jnp.allclose(logits, y_ref, atol=5e-2, rtol=5e-2), "logits mismatch"

    # 2) Ragged batch (exercises the padding fallback + output slicing).
    x_ragged = jax.random.normal(kx2, (5, 1, 28, 28), dtype=jnp.float32)
    logits_r, hidden_r = two_layer_nn_forward(x_ragged, *params)
    jax.block_until_ready((logits_r, hidden_r))
    b, y_ref, z_ref = reference(x_ragged)
    assert logits_r.shape == (b, OUT_FEATURES) and hidden_r.shape == (b, HIDDEN)
    assert jnp.allclose(hidden_r, z_ref, atol=5e-2, rtol=5e-2), "hidden mismatch (ragged)"
    assert jnp.allclose(logits_r, y_ref, atol=5e-2, rtol=5e-2), "logits mismatch (ragged)"

    print("KERNEL_OK")
</pallas_src>

<mosaic_0001>
module attributes {stable_mosaic.version = 11 : i64} {
  func.func @_mlp_kernel(%arg0: i32, %arg1: memref<8x784xf32, #tpu.memory_space<vmem>>, %arg2: memref<784x128xbf16, #tpu.memory_space<vmem>>, %arg3: memref<1x128xf32, #tpu.memory_space<vmem>>, %arg4: memref<128x128xbf16, #tpu.memory_space<vmem>>, %arg5: memref<1x128xf32, #tpu.memory_space<vmem>>, %arg6: memref<8x128xf32, #tpu.memory_space<vmem>>, %arg7: memref<8x128xf32, #tpu.memory_space<vmem>>) attributes {dimension_semantics = [#tpu.dimension_semantics<parallel>], iteration_bounds = array<i64: 1>, scalar_prefetch = 0 : i64, scratch_operands = 0 : i64, tpu.core_type = #tpu.core_type<tc>, window_params = [{transform_indices = @transform_0, window_bounds = array<i64: 8, 784>}, {pipeline_mode = #tpu.pipeline_mode<synchronous>, transform_indices = @transform_1, window_bounds = array<i64: 784, 128>}, {pipeline_mode = #tpu.pipeline_mode<synchronous>, transform_indices = @transform_2, window_bounds = array<i64: 1, 128>}, {pipeline_mode = #tpu.pipeline_mode<synchronous>, transform_indices = @transform_3, window_bounds = array<i64: 128, 128>}, {pipeline_mode = #tpu.pipeline_mode<synchronous>, transform_indices = @transform_4, window_bounds = array<i64: 1, 128>}, {transform_indices = @transform_5, window_bounds = array<i64: 8, 128>}, {transform_indices = @transform_6, window_bounds = array<i64: 8, 128>}]} {
    %c0 = arith.constant 0 : index
    %c0_0 = arith.constant 0 : index
    %0 = vector.load %arg1[%c0, %c0_0] : memref<8x784xf32, #tpu.memory_space<vmem>>, vector<8x784xf32>
    %1 = arith.truncf %0 : vector<8x784xf32> to vector<8x784xbf16>
    %c0_1 = arith.constant 0 : index
    %c0_2 = arith.constant 0 : index
    %2 = vector.load %arg2[%c0_1, %c0_2] : memref<784x128xbf16, #tpu.memory_space<vmem>>, vector<784x128xbf16>
    %cst = arith.constant dense<0.000000e+00> : vector<8x128xf32>
    %3 = tpu.matmul %1, %2, %cst {dimension_numbers = #tpu.dot_dimension_numbers<[1], [0], [0], [1], [0, 0, 1, 1], [], []>} : vector<8x784xbf16>, vector<784x128xbf16>, vector<8x128xf32> -> vector<8x128xf32>
    %c0_3 = arith.constant 0 : index
    %c0_4 = arith.constant 0 : index
    %4 = vector.load %arg3[%c0_3, %c0_4] : memref<1x128xf32, #tpu.memory_space<vmem>>, vector<1x128xf32>
    %5 = vector.broadcast %4 : vector<1x128xf32> to vector<8x128xf32>
    %6 = arith.addf %3, %5 : vector<8x128xf32>
    %cst_5 = arith.constant 0.000000e+00 : f32
    %7 = vector.broadcast %cst_5 : f32 to vector<8x128xf32>
    %8 = arith.maximumf %6, %7 : vector<8x128xf32>
    %c0_6 = arith.constant 0 : index
    %c0_7 = arith.constant 0 : index
    %9 = vector.load %arg7[%c0_6, %c0_7] : memref<8x128xf32, #tpu.memory_space<vmem>>, vector<8x128xf32>
    tpu.vector_store %arg7[%c0_6, %c0_7], %8 {strides = array<i32>} : memref<8x128xf32, #tpu.memory_space<vmem>>, vector<8x128xf32>,
    %10 = arith.truncf %8 : vector<8x128xf32> to vector<8x128xbf16>
    %c0_8 = arith.constant 0 : index
    %c0_9 = arith.constant 0 : index
    %11 = vector.load %arg4[%c0_8, %c0_9] : memref<128x128xbf16, #tpu.memory_space<vmem>>, vector<128x128xbf16>
    %cst_10 = arith.constant dense<0.000000e+00> : vector<8x128xf32>
    %12 = tpu.matmul %10, %11, %cst_10 {dimension_numbers = #tpu.dot_dimension_numbers<[1], [0], [0], [1], [0, 0, 1, 1], [], []>} : vector<8x128xbf16>, vector<128x128xbf16>, vector<8x128xf32> -> vector<8x128xf32>
    %c0_11 = arith.constant 0 : index
    %c0_12 = arith.constant 0 : index
    %13 = vector.load %arg5[%c0_11, %c0_12] : memref<1x128xf32, #tpu.memory_space<vmem>>, vector<1x128xf32>
    %14 = vector.broadcast %13 : vector<1x128xf32> to vector<8x128xf32>
    %15 = arith.addf %12, %14 : vector<8x128xf32>
    %c0_13 = arith.constant 0 : index
    %c0_14 = arith.constant 0 : index
    %16 = vector.load %arg6[%c0_13, %c0_14] : memref<8x128xf32, #tpu.memory_space<vmem>>, vector<8x128xf32>
    tpu.vector_store %arg6[%c0_13, %c0_14], %15 {strides = array<i32>} : memref<8x128xf32, #tpu.memory_space<vmem>>, vector<8x128xf32>,
    return
  }
  func.func @transform_0(%arg0: i32) -> (i32, i32) {
    %c0_i32 = arith.constant 0 : i32
    %c0_i32_0 = arith.constant 0 : i32
    return %arg0, %c0_i32 : i32, i32
  }
  func.func @transform_1(%arg0: i32) -> (i32, i32) {
    %c0_i32 = arith.constant 0 : i32
    %c0_i32_0 = arith.constant 0 : i32
    %c0_i32_1 = arith.constant 0 : i32
    return %c0_i32, %c0_i32_0 : i32, i32
  }
  func.func @transform_2(%arg0: i32) -> (i32, i32) {
    %c0_i32 = arith.constant 0 : i32
    %c0_i32_0 = arith.constant 0 : i32
    %c0_i32_1 = arith.constant 0 : i32
    return %c0_i32, %c0_i32_0 : i32, i32
  }
  func.func @transform_3(%arg0: i32) -> (i32, i32) {
    %c0_i32 = arith.constant 0 : i32
    %c0_i32_0 = arith.constant 0 : i32
    %c0_i32_1 = arith.constant 0 : i32
    return %c0_i32, %c0_i32_0 : i32, i32
  }
  func.func @transform_4(%arg0: i32) -> (i32, i32) {
    %c0_i32 = arith.constant 0 : i32
    %c0_i32_0 = arith.constant 0 : i32
    %c0_i32_1 = arith.constant 0 : i32
    return %c0_i32, %c0_i32_0 : i32, i32
  }
  func.func @transform_5(%arg0: i32) -> (i32, i32) {
    %c0_i32 = arith.constant 0 : i32
    %c0_i32_0 = arith.constant 0 : i32
    return %arg0, %c0_i32 : i32, i32
  }
  func.func @transform_6(%arg0: i32) -> (i32, i32) {
    %c0_i32 = arith.constant 0 : i32
    %c0_i32_0 = arith.constant 0 : i32
    return %arg0, %c0_i32 : i32, i32
  }
}

</mosaic_0001>

<llo_original>
// kernel: _forward_padded.1
$region0: #{_forward_padded.1}
  #allocation0 [shape = 'u32[]', space=smem, size = 0x4, offset = 0x4, fixed_abs, tag = 'smem constant byte address 0x4 - core index']
  #allocation1 [shape = 'u32[144,128]{1,0:T(1,128)}', space=vmem, size = 0x12000, scoped, tag = 'internal scratch']
  %s0 = inlined_call_operand.hbm [shape: f32[8,784], index: 0, kind: input, shape index: {}]
  %s1 = inlined_call_operand.hbm [shape: bf16[784,128], index: 1, kind: input, shape index: {}]
  %s2 = inlined_call_operand.vmem [shape: f32[1,128], index: 2, kind: input, shape index: {}]
  %s3 = inlined_call_operand.hbm [shape: bf16[128,128], index: 3, kind: input, shape index: {}]
  %s4 = inlined_call_operand.vmem [shape: f32[1,128], index: 4, kind: input, shape index: {}]
  %s5 = inlined_call_operand.hbm [shape: f32[8,128], index: 5, kind: output, shape index: {0}]
  %s6 = inlined_call_operand.hbm [shape: f32[8,128], index: 6, kind: output, shape index: {1}]
  %7 = xla_tuple %s5, %s6
  %s8 = sld [smem:[#allocation0]]
  $region50: #{_forward_padded.1} parent=0
    _
  %s10 = ssub.s32 1, %s8
  %s11 = scalar_select 0, %s10, %s8
  $region1: #{_forward_padded.1} parent=0
    #allocation2 [shape = 'u8[28672]{0}', space=vmem, size = 0x7000, scoped, tag = 'input window, operand 0, single buffered']
    #allocation3 [shape = 's32[1]{0}', space=sflag, size = 0x4, scoped, tag = 'scoped memory for _forward_padded.1']
    #allocation4 [shape = 's32[1]{0}', space=sflag, size = 0x4, scoped, tag = 'scoped memory for _forward_padded.1']
    #allocation5 [shape = 'u8[200704]{0}', space=vmem, size = 0x31000, scoped, tag = 'input window, operand 1, single buffered']
    #allocation6 [shape = 's32[1]{0}', space=sflag, size = 0x4, scoped, tag = 'scoped memory for _forward_padded.1']
    #allocation7 [shape = 'u8[32768]{0}', space=vmem, size = 0x8000, scoped, tag = 'input window, operand 3, single buffered']
    #allocation8 [shape = 'u8[4096]{0}', space=vmem, size = 0x1000, scoped, tag = 'output window, operand 0, single buffered']
    #allocation9 [shape = 'u8[4096]{0}', space=vmem, size = 0x1000, scoped, tag = 'output window, operand 1, single buffered']
    #allocation10 [shape = 's32[1]{0}', space=sflag, size = 0x4, scoped, tag = 'scoped memory for _forward_padded.1']
    %12 = vsyncpa [#allocation3], 0
    %13 = vsyncpa [#allocation6], 0
    %14 = vsyncpa [#allocation4], 0
    %15 = vsyncpa [#allocation10], 0
    // Predicated region
    $region2: #{_forward_padded.1} parent=1 // pred_check
      _
    $region3: #{_forward_padded.1} parent=1 // pred_check_branch
      %17 = sbr.rel (0) target = $region5
    $region4: #{_forward_padded.1} parent=1 // pred_region
      %s19 = ssub.s32 896, 896
      %20 = vsyncadd [#allocation3], %s19
      %s22 = sshll.u32 [#allocation2], 4
      %s23 = int_to_ptr.vmem [resolvable:$true] %s22
      %25 = dma.hbm_to_vmem [thread:$0]  %s0, 896, %s23, [#allocation3]
    $region5: #{_forward_padded.1} parent=1 // pred_fallthru
      _
    // Predicated region
    $region6: #{_forward_padded.1} parent=1 // pred_check
      _
    $region7: #{_forward_padded.1} parent=1 // pred_check_branch
      %27 = sbr.rel (0) target = $region9
    $region8: #{_forward_padded.1} parent=1 // pred_region
      %s29 = ssub.s32 6272, 6272
      %30 = vsyncadd [#allocation6], %s29
      %s31 = sshll.u32 [#allocation5], 4
      %s32 = int_to_ptr.vmem [resolvable:$true] %s31
      %37 = dma.hbm_to_vmem [thread:$0]  %s1, 6272, %s32, [#allocation6], 64, 64, 4
    $region9: #{_forward_padded.1} parent=1 // pred_fallthru
      _
    // Predicated region
    $region10: #{_forward_padded.1} parent=1 // pred_check
      _
    $region11: #{_forward_padded.1} parent=1 // pred_check_branch
      %39 = sbr.rel (0) target = $region13
    $region12: #{_forward_padded.1} parent=1 // pred_region
      _
    $region13: #{_forward_padded.1} parent=1 // pred_fallthru
      _
    // Predicated region
    $region14: #{_forward_padded.1} parent=1 // pred_check
      _
    $region15: #{_forward_padded.1} parent=1 // pred_check_branch
      %41 = sbr.rel (0) target = $region17
    $region16: #{_forward_padded.1} parent=1 // pred_region
      %s43 = ssub.s32 1024, 1024
      %44 = vsyncadd [#allocation6], %s43
      %s45 = sshll.u32 [#allocation7], 4
      %s46 = int_to_ptr.vmem [resolvable:$true] %s45
      %51 = dma.hbm_to_vmem [thread:$0]  %s3, 1024, %s46, [#allocation6], 64, 64, 4
    $region17: #{_forward_padded.1} parent=1 // pred_fallthru
      _
    // Predicated region
    $region18: #{_forward_padded.1} parent=1 // pred_check
      _
    $region19: #{_forward_padded.1} parent=1 // pred_check_branch
      %53 = sbr.rel (0) target = $region21
    $region20: #{_forward_padded.1} parent=1 // pred_region
      _
    $region21: #{_forward_padded.1} parent=1 // pred_fallthru
      _
    // Predicated region
    $region22: #{_forward_padded.1} parent=1 // pred_check
      _
    $region23: #{_forward_padded.1} parent=1 // pred_check_branch
      %55 = sbr.rel (0) target = $region25
    $region24: #{_forward_padded.1} parent=1 // pred_region
      %56 = dma.done [#allocation3], 896
    $region25: #{_forward_padded.1} parent=1 // pred_fallthru
      _
    // Predicated region
    $region26: #{_forward_padded.1} parent=1 // pred_check
      _
    $region27: #{_forward_padded.1} parent=1 // pred_check_branch
      %58 = sbr.rel (0) target = $region29
    $region28: #{_forward_padded.1} parent=1 // pred_region
      %59 = dma.done [#allocation6], 6272
    $region29: #{_forward_padded.1} parent=1 // pred_fallthru
      _
    // Predicated region
    $region30: #{_forward_padded.1} parent=1 // pred_check
      _
    $region31: #{_forward_padded.1} parent=1 // pred_check_branch
      %61 = sbr.rel (0) target = $region33
    $region32: #{_forward_padded.1} parent=1 // pred_region
      %62 = dma.done [#allocation6], 1024
    $region33: #{_forward_padded.1} parent=1 // pred_fallthru
      _
    %v64 = vld [vmem:[#allocation2] sm:$0xff]
    %v65 = vld [vmem:[#allocation2 + $0x8] sm:$0xff]
    %v66 = vld [vmem:[#allocation2 + $0x10] sm:$0xff]
    %v67 = vld [vmem:[#allocation2 + $0x18] sm:$0xff]
    %v68 = vld [vmem:[#allocation2 + $0x20] sm:$0xff]
    %v69 = vld [vmem:[#allocation2 + $0x28] sm:$0xff]
    %v70 = vld [vmem:[#allocation2 + $0x30] sm:$0xff]
    %v71 = vpack.c.bf16 %v64, %v64
    %v72 = vpack.c.bf16 %v65, %v65
    %v73 = vpack.c.bf16 %v66, %v66
    %v74 = vpack.c.bf16 %v67, %v67
    %v75 = vpack.c.bf16 %v68, %v68
    %v76 = vpack.c.bf16 %v69, %v69
    %v77 = vpack.c.bf16 %v70, %v70
    %v78 = vld [vmem:[#allocation5] sm:$0xf]
    %v79 = vld [vmem:[#allocation5 + $0x4] sm:$0xf]
    %v80 = vld [vmem:[#allocation5 + $0x8] sm:$0xf]
    %v81 = vld [vmem:[#allocation5 + $0xc] sm:$0xf]
    %v82 = vld [vmem:[#allocation5 + $0x10] sm:$0xf]
    %v83 = vld [vmem:[#allocation5 + $0x14] sm:$0xf]
    %v84 = vld [vmem:[#allocation5 + $0x18] sm:$0xf]
    %v85 = vld [vmem:[#allocation5 + $0x1c] sm:$0xf]
    %v86 = vld [vmem:[#allocation5 + $0x20] sm:$0xf]
    %v87 = vld [vmem:[#allocation5 + $0x24] sm:$0xf]
    %v88 = vld [vmem:[#allocation5 + $0x28] sm:$0xf]
    %v89 = vld [vmem:[#allocation5 + $0x2c] sm:$0xf]
    %v90 = vld [vmem:[#allocation5 + $0x30] sm:$0xf]
    %v91 = vld [vmem:[#allocation5 + $0x34] sm:$0xf]
    %v92 = vld [vmem:[#allocation5 + $0x38] sm:$0xf]
    %v93 = vld [vmem:[#allocation5 + $0x3c] sm:$0xf]
    %v94 = vld [vmem:[#allocation5 + $0x40] sm:$0xf]
    %v95 = vld [vmem:[#allocation5 + $0x44] sm:$0xf]
    %v96 = vld [vmem:[#allocation5 + $0x48] sm:$0xf]
    %v97 = vld [vmem:[#allocation5 + $0x4c] sm:$0xf]
    %v98 = vld [vmem:[#allocation5 + $0x50] sm:$0xf]
    %v99 = vld [vmem:[#allocation5 + $0x54] sm:$0xf]
    %v100 = vld [vmem:[#allocation5 + $0x58] sm:$0xf]
    %v101 = vld [vmem:[#allocation5 + $0x5c] sm:$0xf]
    %v102 = vld [vmem:[#allocation5 + $0x60] sm:$0xf]
    %v103 = vld [vmem:[#allocation5 + $0x64] sm:$0xf]
    %v104 = vld [vmem:[#allocation5 + $0x68] sm:$0xf]
    %v105 = vld [vmem:[#allocation5 + $0x6c] sm:$0xf]
    %v106 = vld [vmem:[#allocation5 + $0x70] sm:$0xf]
    %v107 = vld [vmem:[#allocation5 + $0x74] sm:$0xf]
    %v108 = vld [vmem:[#allocation5 + $0x78] sm:$0xf]
    %v109 = vld [vmem:[#allocation5 + $0x7c] sm:$0xf]
    %v110 = vld [vmem:[#allocation5 + $0x80] sm:$0xf]
    %v111 = vld [vmem:[#allocation5 + $0x84] sm:$0xf]
    %v112 = vld [vmem:[#allocation5 + $0x88] sm:$0xf]
    %v113 = vld [vmem:[#allocation5 + $0x8c] sm:$0xf]
    %v114 = vld [vmem:[#allocation5 + $0x90] sm:$0xf]
    %v115 = vld [vmem:[#allocation5 + $0x94] sm:$0xf]
    %v116 = vld [vmem:[#allocation5 + $0x98] sm:$0xf]
    %v117 = vld [vmem:[#allocation5 + $0x9c] sm:$0xf]
    %v118 = vld [vmem:[#allocation5 + $0xa0] sm:$0xf]
    %v119 = vld [vmem:[#allocation5 + $0xa4] sm:$0xf]
    %v120 = vld [vmem:[#allocation5 + $0xa8] sm:$0xf]
    %v121 = vld [vmem:[#allocation5 + $0xac] sm:$0xf]
    %v122 = vld [vmem:[#allocation5 + $0xb0] sm:$0xf]
    %v123 = vld [vmem:[#allocation5 + $0xb4] sm:$0xf]
    %v124 = vld [vmem:[#allocation5 + $0xb8] sm:$0xf]
    %v125 = vld [vmem:[#allocation5 + $0xbc] sm:$0xf]
    %v126 = vld [vmem:[#allocation5 + $0xc0] sm:$0xf]
    %v127 = vld [vmem:[#allocation5 + $0xc4] sm:$0xf]
    %v128 = vld [vmem:[#allocation5 + $0xc8] sm:$0xf]
    %v129 = vld [vmem:[#allocation5 + $0xcc] sm:$0xf]
    %v130 = vld [vmem:[#allocation5 + $0xd0] sm:$0xf]
    %v131 = vld [vmem:[#allocation5 + $0xd4] sm:$0xf]
    %v132 = vld [vmem:[#allocation5 + $0xd8] sm:$0xf]
    %v133 = vld [vmem:[#allocation5 + $0xdc] sm:$0xf]
    %v134 = vld [vmem:[#allocation5 + $0xe0] sm:$0xf]
    %v135 = vld [vmem:[#allocation5 + $0xe4] sm:$0xf]
    %v136 = vld [vmem:[#allocation5 + $0xe8] sm:$0xf]
    %v137 = vld [vmem:[#allocation5 + $0xec] sm:$0xf]
    %v138 = vld [vmem:[#allocation5 + $0xf0] sm:$0xf]
    %v139 = vld [vmem:[#allocation5 + $0xf4] sm:$0xf]
    %v140 = vld [vmem:[#allocation5 + $0xf8] sm:$0xf]
    %v141 = vld [vmem:[#allocation5 + $0xfc] sm:$0xf]
    %v142 = vld [vmem:[#allocation5 + $0x100] sm:$0xf]
    %v143 = vld [vmem:[#allocation5 + $0x104] sm:$0xf]
    %v144 = vld [vmem:[#allocation5 + $0x108] sm:$0xf]
    %v145 = vld [vmem:[#allocation5 + $0x10c] sm:$0xf]
    %v146 = vld [vmem:[#allocation5 + $0x110] sm:$0xf]
    %v147 = vld [vmem:[#allocation5 + $0x114] sm:$0xf]
    %v148 = vld [vmem:[#allocation5 + $0x118] sm:$0xf]
    %v149 = vld [vmem:[#allocation5 + $0x11c] sm:$0xf]
    %v150 = vld [vmem:[#allocation5 + $0x120] sm:$0xf]
    %v151 = vld [vmem:[#allocation5 + $0x124] sm:$0xf]
    %v152 = vld [vmem:[#allocation5 + $0x128] sm:$0xf]
    %v153 = vld [vmem:[#allocation5 + $0x12c] sm:$0xf]
    %v154 = vld [vmem:[#allocation5 + $0x130] sm:$0xf]
    %v155 = vld [vmem:[#allocation5 + $0x134] sm:$0xf]
    %v156 = vld [vmem:[#allocation5 + $0x138] sm:$0xf]
    %v157 = vld [vmem:[#allocation5 + $0x13c] sm:$0xf]
    %v158 = vld [vmem:[#allocation5 + $0x140] sm:$0xf]
    %v159 = vld [vmem:[#allocation5 + $0x144] sm:$0xf]
    %v160 = vld [vmem:[#allocation5 + $0x148] sm:$0xf]
    %v161 = vld [vmem:[#allocation5 + $0x14c] sm:$0xf]
    %v162 = vld [vmem:[#allocation5 + $0x150] sm:$0xf]
    %v163 = vld [vmem:[#allocation5 + $0x154] sm:$0xf]
    %v164 = vld [vmem:[#allocation5 + $0x158] sm:$0xf]
    %v165 = vld [vmem:[#allocation5 + $0x15c] sm:$0xf]
    %v166 = vld [vmem:[#allocation5 + $0x160] sm:$0xf]
    %v167 = vld [vmem:[#allocation5 + $0x164] sm:$0xf]
    %v168 = vld [vmem:[#allocation5 + $0x168] sm:$0xf]
    %v169 = vld [vmem:[#allocation5 + $0x16c] sm:$0xf]
    %v170 = vld [vmem:[#allocation5 + $0x170] sm:$0xf]
    %v171 = vld [vmem:[#allocation5 + $0x174] sm:$0xf]
    %v172 = vld [vmem:[#allocation5 + $0x178] sm:$0xf]
    %v173 = vld [vmem:[#allocation5 + $0x17c] sm:$0xf]
    %v174 = vld [vmem:[#allocation5 + $0x180] sm:$0xf]
    %v175 = vld [vmem:[#allocation5 + $0x184] sm:$0xf]
    %v176 = vld [vmem:[%s2] sm:$0x1]
    %v178 = vlaneseq
    %v179 = vshrl.u32 %v178, 7
    %v180 = vsub.s32 0, %v179
    %v181 = vrot.slane %v176, %v180
    %v281 = vunpack.c.l.b16 %v78
    %v282 = vunpack.c.l.b16 %v79
    %v283 = vunpack.c.l.b16 %v80
    %v284 = vunpack.c.l.b16 %v81
    %v285 = vunpack.c.l.b16 %v82
    %v286 = vunpack.c.l.b16 %v83
    %v287 = vunpack.c.l.b16 %v84
    %v288 = vunpack.c.l.b16 %v85
    %v289 = vunpack.c.l.b16 %v86
    %v290 = vunpack.c.l.b16 %v87
    %v291 = vunpack.c.l.b16 %v88
    %v292 = vunpack.c.l.b16 %v89
    %v293 = vunpack.c.l.b16 %v90
    %v294 = vunpack.c.l.b16 %v91
    %v295 = vunpack.c.l.b16 %v92
    %v296 = vunpack.c.l.b16 %v93
    %v297 = vunpack.c.l.b16 %v94
    %v298 = vunpack.c.l.b16 %v95
    %v299 = vunpack.c.l.b16 %v96
    %v300 = vunpack.c.l.b16 %v97
    %v301 = vunpack.c.l.b16 %v98
    %v302 = vunpack.c.l.b16 %v99
    %v303 = vunpack.c.l.b16 %v100
    %v304 = vunpack.c.l.b16 %v101
    %v305 = vunpack.c.l.b16 %v102
    %v306 = vunpack.c.l.b16 %v103
    %v307 = vunpack.c.l.b16 %v104
    %v308 = vunpack.c.l.b16 %v105
    %v309 = vunpack.c.l.b16 %v106
    %v310 = vunpack.c.l.b16 %v107
    %v311 = vunpack.c.l.b16 %v108
    %v312 = vunpack.c.l.b16 %v109
    %v313 = vunpack.c.l.b16 %v110
    %v314 = vunpack.c.l.b16 %v111
    %v315 = vunpack.c.l.b16 %v112
    %v316 = vunpack.c.l.b16 %v113
    %v317 = vunpack.c.l.b16 %v114
    %v318 = vunpack.c.l.b16 %v115
    %v319 = vunpack.c.l.b16 %v116
    %v320 = vunpack.c.l.b16 %v117
    %v321 = vunpack.c.l.b16 %v118
    %v322 = vunpack.c.l.b16 %v119
    %v323 = vunpack.c.l.b16 %v120
    %v324 = vunpack.c.l.b16 %v121
    %v325 = vunpack.c.l.b16 %v122
    %v326 = vunpack.c.l.b16 %v123
    %v327 = vunpack.c.l.b16 %v124
    %v328 = vunpack.c.l.b16 %v125
    %v329 = vunpack.c.l.b16 %v126
    %v330 = vunpack.c.l.b16 %v127
    %v331 = vunpack.c.l.b16 %v128
    %v332 = vunpack.c.l.b16 %v129
    %v333 = vunpack.c.l.b16 %v130
    %v334 = vunpack.c.l.b16 %v131
    %v335 = vunpack.c.l.b16 %v132
    %v336 = vunpack.c.l.b16 %v133
    %v337 = vunpack.c.l.b16 %v134
    %v338 = vunpack.c.l.b16 %v135
    %v339 = vunpack.c.l.b16 %v136
    %v340 = vunpack.c.l.b16 %v137
    %v341 = vunpack.c.l.b16 %v138
    %v342 = vunpack.c.l.b16 %v139
    %v343 = vunpack.c.l.b16 %v140
    %v344 = vunpack.c.l.b16 %v141
    %v345 = vunpack.c.l.b16 %v142
    %v346 = vunpack.c.l.b16 %v143
    %v347 = vunpack.c.l.b16 %v144
    %v348 = vunpack.c.l.b16 %v145
    %v349 = vunpack.c.l.b16 %v146
    %v350 = vunpack.c.l.b16 %v147
    %v351 = vunpack.c.l.b16 %v148
    %v352 = vunpack.c.l.b16 %v149
    %v353 = vunpack.c.l.b16 %v150
    %v354 = vunpack.c.l.b16 %v151
    %v355 = vunpack.c.l.b16 %v152
    %v356 = vunpack.c.l.b16 %v153
    %v357 = vunpack.c.l.b16 %v154
    %v358 = vunpack.c.l.b16 %v155
    %v359 = vunpack.c.l.b16 %v156
    %v360 = vunpack.c.l.b16 %v157
    %v361 = vunpack.c.l.b16 %v158
    %v362 = vunpack.c.l.b16 %v159
    %v363 = vunpack.c.l.b16 %v160
    %v364 = vunpack.c.l.b16 %v161
    %v365 = vunpack.c.l.b16 %v162
    %v366 = vunpack.c.l.b16 %v163
    %v367 = vunpack.c.l.b16 %v164
    %v368 = vunpack.c.l.b16 %v165
    %v369 = vunpack.c.l.b16 %v166
    %v370 = vunpack.c.l.b16 %v167
    %v371 = vunpack.c.l.b16 %v168
    %v372 = vunpack.c.l.b16 %v169
    %v373 = vunpack.c.l.b16 %v170
    %v374 = vunpack.c.l.b16 %v171
    %v375 = vunpack.c.l.b16 %v172
    %v376 = vunpack.c.l.b16 %v173
    %v377 = vunpack.c.l.b16 %v174
    %v378 = vunpack.c.l.b16 %v175
    %v379 = vpack.c.b16 %v282, %v281
    %v380 = vpack.c.b16 %v284, %v283
    %v381 = vpack.c.b16 %v286, %v285
    %v382 = vpack.c.b16 %v288, %v287
    %v383 = vpack.c.b16 %v290, %v289
    %v384 = vpack.c.b16 %v292, %v291
    %v385 = vpack.c.b16 %v294, %v293
    %v386 = vpack.c.b16 %v296, %v295
    %v387 = vpack.c.b16 %v298, %v297
    %v388 = vpack.c.b16 %v300, %v299
    %v389 = vpack.c.b16 %v302, %v301
    %v390 = vpack.c.b16 %v304, %v303
    %v391 = vpack.c.b16 %v306, %v305
    %v392 = vpack.c.b16 %v308, %v307
    %v393 = vpack.c.b16 %v310, %v309
    %v394 = vpack.c.b16 %v312, %v311
    %v395 = vpack.c.b16 %v314, %v313
    %v396 = vpack.c.b16 %v316, %v315
    %v397 = vpack.c.b16 %v318, %v317
    %v398 = vpack.c.b16 %v320, %v319
    %v399 = vpack.c.b16 %v322, %v321
    %v400 = vpack.c.b16 %v324, %v323
    %v401 = vpack.c.b16 %v326, %v325
    %v402 = vpack.c.b16 %v328, %v327
    %v403 = vpack.c.b16 %v330, %v329
    %v404 = vpack.c.b16 %v332, %v331
    %v405 = vpack.c.b16 %v334, %v333
    %v406 = vpack.c.b16 %v336, %v335
    %v407 = vpack.c.b16 %v338, %v337
    %v408 = vpack.c.b16 %v340, %v339
    %v409 = vpack.c.b16 %v342, %v341
    %v410 = vpack.c.b16 %v344, %v343
    %v411 = vpack.c.b16 %v346, %v345
    %v412 = vpack.c.b16 %v348, %v347
    %v413 = vpack.c.b16 %v350, %v349
    %v414 = vpack.c.b16 %v352, %v351
    %v415 = vpack.c.b16 %v354, %v353
    %v416 = vpack.c.b16 %v356, %v355
    %v417 = vpack.c.b16 %v358, %v357
    %v418 = vpack.c.b16 %v360, %v359
    %v419 = vpack.c.b16 %v362, %v361
    %v420 = vpack.c.b16 %v364, %v363
    %v421 = vpack.c.b16 %v366, %v365
    %v422 = vpack.c.b16 %v368, %v367
    %v423 = vpack.c.b16 %v370, %v369
    %v424 = vpack.c.b16 %v372, %v371
    %v425 = vpack.c.b16 %v374, %v373
    %v426 = vpack.c.b16 %v376, %v375
    %v427 = vpack.c.b16 %v378, %v377
    %vm477 = vcmask 130048
    %v479 = vsel %vm477, %v77, 0
    %481 = vmatprep.subr.bf16.mxu0 0
    %482 = vmatpush1.bf16.msra.mxu0 %v379
    %483 = vmatprep.subr.bf16.mxu0 0
    %484 = vmatpush1.bf16.msra.mxu0 %v380
    %485 = vmatprep.subr.bf16.mxu0 0
    %486 = vmatpush1.bf16.msra.mxu0 %v381
    %487 = vmatprep.subr.bf16.mxu0 0
    %488 = vmatpush1.bf16.msra.mxu0 %v382
    %489 = vmatprep.subr.bf16.mxu0 0
    %490 = vmatpush1.bf16.msra.mxu0 %v383
    %491 = vmatprep.subr.bf16.mxu0 0
    %492 = vmatpush1.bf16.msra.mxu0 %v384
    %493 = vmatprep.subr.bf16.mxu0 0
    %494 = vmatpush1.bf16.msra.mxu0 %v385
    %495 = vmatprep.subr.bf16.mxu0 0
    %496 = vmatpush1.bf16.msra.mxu0 %v386
    %497 = vmatprep.subr.bf16.mxu0 0
    %498 = vmatpush1.bf16.msra.mxu0 %v387
    %499 = vmatprep.subr.bf16.mxu0 0
    %500 = vmatpush1.bf16.msra.mxu0 %v388
    %501 = vmatprep.subr.bf16.mxu0 0
    %502 = vmatpush1.bf16.msra.mxu0 %v389
    %503 = vmatprep.subr.bf16.mxu0 0
    %504 = vmatpush1.bf16.msra.mxu0 %v390
    %505 = vmatprep.subr.bf16.mxu0 0
    %506 = vmatpush1.bf16.msra.mxu0 %v391
    %507 = vmatprep.subr.bf16.mxu0 0
    %508 = vmatpush1.bf16.msra.mxu0 %v392
    %509 = vmatprep.subr.bf16.mxu0 0
    %510 = vmatpush1.bf16.msra.mxu0 %v393
    %511 = vmatprep.subr.bf16.mxu0 0
    %512 = vmatpush1.bf16.msra.mxu0 %v394
    %513 = vmatprep.mubr.bf16.mxu0 %v72
    %514 = vmatmul.mubr.bf16.gmra.mrb[0].mxu0 %v71
    %v515 = vpop.f32.mrb[0].mxu0
    %v516 = vadd.f32 %v181, %v515
    %v517 = vpop.f32.mrb[0].mxu0
    %v518 = vpop.f32.mrb[0].mxu0
    %v519 = vpop.f32.mrb[0].mxu0
    %520 = vdwg.mxu0
    %521 = vmatprep.subr.bf16.mxu0 0
    %522 = vmatpush1.bf16.msra.mxu0 %v395
    %523 = vmatprep.subr.bf16.mxu0 0
    %524 = vmatpush1.bf16.msra.mxu0 %v396
    %525 = vmatprep.subr.bf16.mxu0 0
    %526 = vmatpush1.bf16.msra.mxu0 %v397
    %527 = vmatprep.subr.bf16.mxu0 0
    %528 = vmatpush1.bf16.msra.mxu0 %v398
    %529 = vmatprep.subr.bf16.mxu0 0
    %530 = vmatpush1.bf16.msra.mxu0 %v399
    %531 = vmatprep.subr.bf16.mxu0 0
    %532 = vmatpush1.bf16.msra.mxu0 %v400
    %533 = vmatprep.subr.bf16.mxu0 0
    %534 = vmatpush1.bf16.msra.mxu0 %v401
    %535 = vmatprep.subr.bf16.mxu0 0
    %536 = vmatpush1.bf16.msra.mxu0 %v402
    %537 = vmatprep.subr.bf16.mxu0 0
    %538 = vmatpush1.bf16.msra.mxu0 %v403
    %539 = vmatprep.subr.bf16.mxu0 0
    %540 = vmatpush1.bf16.msra.mxu0 %v404
    %541 = vmatprep.subr.bf16.mxu0 0
    %542 = vmatpush1.bf16.msra.mxu0 %v405
    %543 = vmatprep.subr.bf16.mxu0 0
    %544 = vmatpush1.bf16.msra.mxu0 %v406
    %545 = vmatprep.subr.bf16.mxu0 0
    %546 = vmatpush1.bf16.msra.mxu0 %v407
    %547 = vmatprep.subr.bf16.mxu0 0
    %548 = vmatpush1.bf16.msra.mxu0 %v408
    %549 = vmatprep.subr.bf16.mxu0 0
    %550 = vmatpush1.bf16.msra.mxu0 %v409
    %551 = vmatprep.subr.bf16.mxu0 0
    %552 = vmatpush1.bf16.msra.mxu0 %v410
    %553 = vmatprep.mubr.bf16.mxu0 %v74
    %554 = vmatmul.mubr.bf16.gmra.mrb[0].mxu0 %v73
    %v555 = vpop.f32.mrb[0].mxu0
    %v556 = vadd.f32 %v516, %v555
    %v557 = vpop.f32.mrb[0].mxu0
    %v558 = vpop.f32.mrb[0].mxu0
    %v559 = vpop.f32.mrb[0].mxu0
    %560 = vdwg.mxu0
    %561 = vmatprep.subr.bf16.mxu0 0
    %562 = vmatpush1.bf16.msra.mxu0 %v411
    %563 = vmatprep.subr.bf16.mxu0 0
    %564 = vmatpush1.bf16.msra.mxu0 %v412
    %565 = vmatprep.subr.bf16.mxu0 0
    %566 = vmatpush1.bf16.msra.mxu0 %v413
    %567 = vmatprep.subr.bf16.mxu0 0
    %568 = vmatpush1.bf16.msra.mxu0 %v414
    %569 = vmatprep.subr.bf16.mxu0 0
    %570 = vmatpush1.bf16.msra.mxu0 %v415
    %571 = vmatprep.subr.bf16.mxu0 0
    %572 = vmatpush1.bf16.msra.mxu0 %v416
    %573 = vmatprep.subr.bf16.mxu0 0
    %574 = vmatpush1.bf16.msra.mxu0 %v417
    %575 = vmatprep.subr.bf16.mxu0 0
    %576 = vmatpush1.bf16.msra.mxu0 %v418
    %577 = vmatprep.subr.bf16.mxu0 0
    %578 = vmatpush1.bf16.msra.mxu0 %v419
    %579 = vmatprep.subr.bf16.mxu0 0
    %580 = vmatpush1.bf16.msra.mxu0 %v420
    %581 = vmatprep.subr.bf16.mxu0 0
    %582 = vmatpush1.bf16.msra.mxu0 %v421
    %583 = vmatprep.subr.bf16.mxu0 0
    %584 = vmatpush1.bf16.msra.mxu0 %v422
    %585 = vmatprep.subr.bf16.mxu0 0
    %586 = vmatpush1.bf16.msra.mxu0 %v423
    %587 = vmatprep.subr.bf16.mxu0 0
    %588 = vmatpush1.bf16.msra.mxu0 %v424
    %589 = vmatprep.subr.bf16.mxu0 0
    %590 = vmatpush1.bf16.msra.mxu0 %v425
    %591 = vmatprep.subr.bf16.mxu0 0
    %592 = vmatpush1.bf16.msra.mxu0 %v426
    %593 = vmatprep.mubr.bf16.mxu0 %v76
    %594 = vmatmul.mubr.bf16.gmra.mrb[0].mxu0 %v75
    %v595 = vpop.f32.mrb[0].mxu0
    %v596 = vadd.f32 %v556, %v595
    %v597 = vpop.f32.mrb[0].mxu0
    %v598 = vpop.f32.mrb[0].mxu0
    %v599 = vpop.f32.mrb[0].mxu0
    %600 = vdwg.mxu0
    %601 = vmatprep.subr.bf16.mxu0 0
    %602 = vmatpush1.bf16.msra.mxu0 %v427
    %603 = vmatprep.subr.bf16.mxu0 0
    %604 = vmatpush1.bf16.msra.mxu0 0
    %605 = vmatprep.subr.bf16.mxu0 0
    %606 = vmatpush1.bf16.msra.mxu0 0
    %607 = vmatprep.subr.bf16.mxu0 0
    %608 = vmatpush1.bf16.msra.mxu0 0
    %609 = vmatprep.subr.bf16.mxu0 0
    %610 = vmatpush1.bf16.msra.mxu0 0
    %611 = vmatprep.subr.bf16.mxu0 0
    %612 = vmatpush1.bf16.msra.mxu0 0
    %613 = vmatprep.subr.bf16.mxu0 0
    %614 = vmatpush1.bf16.msra.mxu0 0
    %615 = vmatprep.subr.bf16.mxu0 0
    %616 = vmatpush1.bf16.msra.mxu0 0
    %617 = vmatprep.subr.bf16.mxu0 0
    %618 = vmatpush1.bf16.msra.mxu0 0
    %619 = vmatprep.subr.bf16.mxu0 0
    %620 = vmatpush1.bf16.msra.mxu0 0
    %621 = vmatprep.subr.bf16.mxu0 0
    %622 = vmatpush1.bf16.msra.mxu0 0
    %623 = vmatprep.subr.bf16.mxu0 0
    %624 = vmatpush1.bf16.msra.mxu0 0
    %625 = vmatprep.subr.bf16.mxu0 0
    %626 = vmatpush1.bf16.msra.mxu0 0
    %627 = vmatprep.subr.bf16.mxu0 0
    %628 = vmatpush1.bf16.msra.mxu0 0
    %629 = vmatprep.subr.bf16.mxu0 0
    %630 = vmatpush1.bf16.msra.mxu0 0
    %631 = vmatprep.subr.bf16.mxu0 0
    %632 = vmatpush1.bf16.msra.mxu0 0
    %633 = vmatprep.mubr.bf16.mxu0 0
    %634 = vmatmul.mubr.bf16.gmra.mrb[0].mxu0 %v479
    %v635 = vpop.f32.mrb[0].mxu0
    %v636 = vadd.f32 %v596, %v635
    %v637 = vpop.f32.mrb[0].mxu0
    %v638 = vpop.f32.mrb[0].mxu0
    %v639 = vpop.f32.mrb[0].mxu0
    %640 = vdwg.mxu0
    %v641 = vmax.f32 %v636, 0.0
    %642 = vst [vmem:[#allocation9] sm:$0xff] %v641
    %v643 = vpack.c.bf16 %v641, %v641
    %v644 = vld [vmem:[#allocation7] sm:$0xf]
    %v645 = vld [vmem:[#allocation7 + $0x4] sm:$0xf]
    %v646 = vld [vmem:[#allocation7 + $0x8] sm:$0xf]
    %v647 = vld [vmem:[#allocation7 + $0xc] sm:$0xf]
    %v648 = vld [vmem:[#allocation7 + $0x10] sm:$0xf]
    %v649 = vld [vmem:[#allocation7 + $0x14] sm:$0xf]
    %v650 = vld [vmem:[#allocation7 + $0x18] sm:$0xf]
    %v651 = vld [vmem:[#allocation7 + $0x1c] sm:$0xf]
    %v652 = vld [vmem:[#allocation7 + $0x20] sm:$0xf]
    %v653 = vld [vmem:[#allocation7 + $0x24] sm:$0xf]
    %v654 = vld [vmem:[#allocation7 + $0x28] sm:$0xf]
    %v655 = vld [vmem:[#allocation7 + $0x2c] sm:$0xf]
    %v656 = vld [vmem:[#allocation7 + $0x30] sm:$0xf]
    %v657 = vld [vmem:[#allocation7 + $0x34] sm:$0xf]
    %v658 = vld [vmem:[#allocation7 + $0x38] sm:$0xf]
    %v659 = vld [vmem:[#allocation7 + $0x3c] sm:$0xf]
    %v660 = vld [vmem:[%s4] sm:$0x1]
    %v662 = vlaneseq
    %v663 = vshrl.u32 %v662, 7
    %v664 = vsub.s32 0, %v663
    %v665 = vrot.slane %v660, %v664
    %v683 = vunpack.c.l.b16 %v644
    %v684 = vunpack.c.l.b16 %v645
    %v685 = vunpack.c.l.b16 %v646
    %v686 = vunpack.c.l.b16 %v647
    %v687 = vunpack.c.l.b16 %v648
    %v688 = vunpack.c.l.b16 %v649
    %v689 = vunpack.c.l.b16 %v650
    %v690 = vunpack.c.l.b16 %v651
    %v691 = vunpack.c.l.b16 %v652
    %v692 = vunpack.c.l.b16 %v653
    %v693 = vunpack.c.l.b16 %v654
    %v694 = vunpack.c.l.b16 %v655
    %v695 = vunpack.c.l.b16 %v656
    %v696 = vunpack.c.l.b16 %v657
    %v697 = vunpack.c.l.b16 %v658
    %v698 = vunpack.c.l.b16 %v659
    %v699 = vpack.c.b16 %v684, %v683
    %v700 = vpack.c.b16 %v686, %v685
    %v701 = vpack.c.b16 %v688, %v687
    %v702 = vpack.c.b16 %v690, %v689
    %v703 = vpack.c.b16 %v692, %v691
    %v704 = vpack.c.b16 %v694, %v693
    %v705 = vpack.c.b16 %v696, %v695
    %v706 = vpack.c.b16 %v698, %v697
    %715 = vmatprep.subr.bf16.mxu0 0
    %716 = vmatpush1.bf16.msra.mxu0 %v699
    %717 = vmatprep.subr.bf16.mxu0 0
    %718 = vmatpush1.bf16.msra.mxu0 %v700
    %719 = vmatprep.subr.bf16.mxu0 0
    %720 = vmatpush1.bf16.msra.mxu0 %v701
    %721 = vmatprep.subr.bf16.mxu0 0
    %722 = vmatpush1.bf16.msra.mxu0 %v702
    %723 = vmatprep.subr.bf16.mxu0 0
    %724 = vmatpush1.bf16.msra.mxu0 %v703
    %725 = vmatprep.subr.bf16.mxu0 0
    %726 = vmatpush1.bf16.msra.mxu0 %v704
    %727 = vmatprep.subr.bf16.mxu0 0
    %728 = vmatpush1.bf16.msra.mxu0 %v705
    %729 = vmatprep.subr.bf16.mxu0 0
    %730 = vmatpush1.bf16.msra.mxu0 %v706
    %731 = vmatprep.subr.bf16.mxu0 0
    %732 = vmatpush1.bf16.msra.mxu0 0
    %733 = vmatprep.subr.bf16.mxu0 0
    %734 = vmatpush1.bf16.msra.mxu0 0
    %735 = vmatprep.subr.bf16.mxu0 0
    %736 = vmatpush1.bf16.msra.mxu0 0
    %737 = vmatprep.subr.bf16.mxu0 0
    %738 = vmatpush1.bf16.msra.mxu0 0
    %739 = vmatprep.subr.bf16.mxu0 0
    %740 = vmatpush1.bf16.msra.mxu0 0
    %741 = vmatprep.subr.bf16.mxu0 0
    %742 = vmatpush1.bf16.msra.mxu0 0
    %743 = vmatprep.subr.bf16.mxu0 0
    %744 = vmatpush1.bf16.msra.mxu0 0
    %745 = vmatprep.subr.bf16.mxu0 0
    %746 = vmatpush1.bf16.msra.mxu0 0
    %747 = vmatprep.mubr.bf16.mxu0 0
    %748 = vmatmul.mubr.bf16.gmra.mrb[0].mxu0 %v643
    %v749 = vpop.f32.mrb[0].mxu0
    %v750 = vadd.f32 %v665, %v749
    %v751 = vpop.f32.mrb[0].mxu0
    %v752 = vpop.f32.mrb[0].mxu0
    %v753 = vpop.f32.mrb[0].mxu0
    %754 = vdwg.mxu0
    %755 = vst [vmem:[#allocation8] sm:$0xff] %v750
    // Predicated region
    $region34: #{_forward_padded.1} parent=1 // pred_check
      _
    $region35: #{_forward_padded.1} parent=1 // pred_check_branch
      %757 = sbr.rel (0) target = $region37
    $region36: #{_forward_padded.1} parent=1 // pred_region
      %s759 = ssub.s32 128, 128
      %760 = vsyncadd [#allocation4], %s759
      %s762 = sshll.u32 [#allocation8], 4
      %s763 = int_to_ptr.vmem [resolvable:$true] %s762
      %765 = dma.vmem_to_hbm [thread:$0]  %s763, 128, %s5, [#allocation4]
    $region37: #{_forward_padded.1} parent=1 // pred_fallthru
      _
    // Predicated region
    $region38: #{_forward_padded.1} parent=1 // pred_check
      _
    $region39: #{_forward_padded.1} parent=1 // pred_check_branch
      %767 = sbr.rel (0) target = $region41
    $region40: #{_forward_padded.1} parent=1 // pred_region
      %s769 = ssub.s32 128, 128
      %770 = vsyncadd [#allocation10], %s769
      %s772 = sshll.u32 [#allocation9], 4
      %s773 = int_to_ptr.vmem [resolvable:$true] %s772
      %775 = dma.vmem_to_hbm [thread:$0]  %s773, 128, %s6, [#allocation10]
    $region41: #{_forward_padded.1} parent=1 // pred_fallthru
      _
    // Predicated region
    $region42: #{_forward_padded.1} parent=1 // pred_check
      _
    $region43: #{_forward_padded.1} parent=1 // pred_check_branch
      %777 = sbr.rel (0) target = $region45
    $region44: #{_forward_padded.1} parent=1 // pred_region
      %778 = dma.done [#allocation4], 128
    $region45: #{_forward_padded.1} parent=1 // pred_fallthru
      _
    // Predicated region
    $region46: #{_forward_padded.1} parent=1 // pred_check
      _
    $region47: #{_forward_padded.1} parent=1 // pred_check_branch
      %780 = sbr.rel (0) target = $region49
    $region48: #{_forward_padded.1} parent=1 // pred_region
      %781 = dma.done [#allocation10], 128
    $region49: #{_forward_padded.1} parent=1 // pred_fallthru
      _
    %782 = vsyncpa [#allocation3], 1
    %783 = vsyncpa [#allocation6], 1
    %784 = vsyncpa [#allocation4], 1
    %785 = vsyncpa [#allocation10], 1

</llo_original>
